<compile_context>
chip_gen: v7x
topology: tpu7x:2x2x1
jax: 0.10.0
libtpu: 0.0.40
codegen_flags: <defaults>
</compile_context>

<pallas_src>
import jax
import jax.numpy as jnp
from jax.experimental import pallas as pl
from jax.experimental.pallas import tpu as pltpu


def _round_up(x, m):
    return (x + m - 1) // m * m


def _sublane_pack(dtype):
    # Rows per packed vreg sublane group: 8 for f32, 16 for bf16, 32 for int8/fp8.
    return max(8, 32 // jnp.dtype(dtype).itemsize)


def _vmem_limit_bytes():
    # Generation-aware scoped-VMEM limit: ~half of physical capacity
    # (-> 64 MiB on v5e/v6e's 128 MiB VMEM, 32 MiB on v7x's 64 MiB/TC),
    # leaving headroom for Mosaic internal scratch and co-resident fusions.
    try:
        cap = int(pltpu.get_tpu_info().vmem_capacity_bytes)
    except Exception:
        cap = 128 << 20
    return int(max(32 << 20, min(cap // 2, 64 << 20)))


def _ablate_kernel(x_ref, d_ref, o_ref):
    x = x_ref[...]          # (TM, D) activations, native dtype (typically bf16)
    d = d_ref[...]          # (1, D)  refusal direction, cast to x.dtype by wrapper
    # Row dot product: multiply in the input dtype, accumulate in f32 (VPU + XLU;
    # the MXU is idle and the op is HBM-bound anyway).
    proj = jnp.sum(x * d, axis=-1, keepdims=True, dtype=jnp.float32)   # (TM, 1) f32
    # Rank-1 correction applied in the input dtype: no full-tile f32 intermediate
    # (matters on v5e, which has no bf16 VALU); proj cast once per row.
    o_ref[...] = (x - proj.astype(x.dtype) * d).astype(o_ref.dtype)


def _pick_tile_rows(rows, d_model, itemsize, requested, vmem_budget_bytes, pack):
    if requested is not None:
        tm = _round_up(max(int(requested), pack), pack)
    else:
        # 4 pipelined VMEM buffers (x + out, double-buffered each) must fit the budget.
        per_row_bytes = 4 * d_model * itemsize
        tm = (vmem_budget_bytes // max(per_row_bytes, 1)) // pack * pack
        tm = max(pack, min(1024, tm))
        # Megacore / pipelining: aim for >= 4 grid steps (>= 2 per TensorCore on v7x)
        # whenever the row count allows it.
        tm = min(tm, max(pack, _round_up(pl.cdiv(rows, 4), pack)))
    if rows <= tm:
        # Single full-extent block: always a legal block shape, no ragged handling.
        return rows
    return tm


def direction_ablation(x, refusal_dir, *, tile_rows=None):
    """x: [..., D] activations, refusal_dir: [D].

    Removes the projection of x onto refusal_dir. Returns same shape/dtype as x.
    """
    orig_shape = x.shape
    D = orig_shape[-1]
    rows = 1
    for s in orig_shape[:-1]:
        rows *= s

    x2d = x.reshape(rows, D)
    d2d = refusal_dir.reshape(1, D).astype(x.dtype)

    itemsize = jnp.dtype(x.dtype).itemsize
    pack = _sublane_pack(x.dtype)
    # Working-set budget for the x/out pipeline buffers (independent of the scoped limit).
    vmem_budget = 32 << 20
    tm = _pick_tile_rows(rows, D, itemsize, tile_rows, vmem_budget, pack)

    grid = pl.cdiv(rows, tm)   # ragged last block is masked on write by Pallas

    out = pl.pallas_call(
        _ablate_kernel,
        out_shape=jax.ShapeDtypeStruct((rows, D), x.dtype),
        grid_spec=pltpu.PrefetchScalarGridSpec(
            num_scalar_prefetch=0,
            grid=(grid,),
            in_specs=[
                pl.BlockSpec((tm, D), lambda i: (i, 0)),
                pl.BlockSpec((1, D), lambda i: (0, 0)),
            ],
            out_specs=pl.BlockSpec((tm, D), lambda i: (i, 0)),
        ),
        compiler_params=pltpu.CompilerParams(
            dimension_semantics=("parallel",),
            vmem_limit_bytes=_vmem_limit_bytes(),
        ),
        cost_estimate=pl.CostEstimate(
            flops=4 * rows * D,
            transcendentals=0,
            bytes_accessed=2 * rows * D * itemsize + D * itemsize,
        ),
    )(x2d, d2d)

    return out.reshape(orig_shape)


class AblationDecoderLayer:
    """JAX/Pallas mirror of the PyTorch AblationDecoderLayer.

    original_layer: a callable taking (hidden_states, *args, **kwargs).
    Run the whole __call__ under one jax.jit so the ablation pass and the wrapped
    layer live in the same program (best we can do without fusing into its first op).
    """

    def __init__(self, original_layer, refusal_dir):
        self.original_layer = original_layer
        # Matches `refusal_dir = refusal_dir.to(torch.bfloat16)` in the reference.
        self.refusal_dir = refusal_dir.astype(jnp.bfloat16)

    def __call__(self, *args, **kwargs):
        hidden_states = args[0]
        ablated = direction_ablation(hidden_states, self.refusal_dir)
        args = (ablated,) + args[1:]
        return self.original_layer(*args, **kwargs)


def _reference(x, d):
    xf = x.astype(jnp.float32)
    df = d.astype(jnp.float32)
    proj = jnp.sum(xf * df, axis=-1, keepdims=True) * df
    return (xf - proj).astype(x.dtype)


if __name__ == "__main__":
    key = jax.random.PRNGKey(0)
    k_x, k_d, k_x2, k_d2, k_x3, k_d3 = jax.random.split(key, 6)

    # --- test 1: small bf16 input through the layer class, under one jit with the
    #             (identity) original layer; single full-extent block. ---
    B, S, D = 2, 8, 128
    x = jax.random.normal(k_x, (B, S, D), dtype=jnp.float32).astype(jnp.bfloat16)
    d = jax.random.normal(k_d, (D,), dtype=jnp.float32)
    d = d / jnp.linalg.norm(d)  # deterministic unit direction

    layer = AblationDecoderLayer(original_layer=lambda h: h, refusal_dir=d)
    out = jax.block_until_ready(jax.jit(lambda h: layer(h))(x))
    ref = _reference(x, d.astype(jnp.bfloat16))
    err = jnp.max(jnp.abs(out.astype(jnp.float32) - ref.astype(jnp.float32)))
    assert out.shape == (B, S, D) and out.dtype == x.dtype
    assert float(err) < 1e-1, f"test1 mismatch vs reference: {err}"

    # --- test 2: ragged grid (rows=111 not divisible by the 32-row tile), bf16. ---
    B2, S2, D2 = 3, 37, 256
    x2 = jax.random.normal(k_x2, (B2, S2, D2), dtype=jnp.float32).astype(jnp.bfloat16)
    d2 = jax.random.normal(k_d2, (D2,), dtype=jnp.float32)
    d2 = (d2 / jnp.linalg.norm(d2)).astype(jnp.bfloat16)
    out2 = jax.block_until_ready(direction_ablation(x2, d2))
    ref2 = _reference(x2, d2)
    err2 = jnp.max(jnp.abs(out2.astype(jnp.float32) - ref2.astype(jnp.float32)))
    assert out2.shape == (B2, S2, D2) and out2.dtype == x2.dtype
    assert float(err2) < 1e-1, f"test2 (ragged bf16) mismatch vs reference: {err2}"

    # --- test 3: f32 dtype path (8-row sublane packing) with a ragged last block. ---
    B3, S3, D3 = 5, 7, 384
    x3 = jax.random.normal(k_x3, (B3, S3, D3), dtype=jnp.float32)
    d3 = jax.random.normal(k_d3, (D3,), dtype=jnp.float32)
    d3 = d3 / jnp.linalg.norm(d3)
    out3 = jax.block_until_ready(direction_ablation(x3, d3))
    ref3 = _reference(x3, d3)
    err3 = jnp.max(jnp.abs(out3 - ref3))
    assert out3.shape == (B3, S3, D3) and out3.dtype == x3.dtype
    assert float(err3) < 1e-3, f"test3 (ragged f32) mismatch vs reference: {err3}"

    print("KERNEL_OK")
</pallas_src>

<mosaic_0001>
module attributes {stable_mosaic.version = 11 : i64} {
  func.func @_ablate_kernel(%arg0: i32, %arg1: memref<16x128xbf16, #tpu.memory_space<vmem>>, %arg2: memref<1x128xbf16, #tpu.memory_space<vmem>>, %arg3: memref<16x128xbf16, #tpu.memory_space<vmem>>) attributes {dimension_semantics = [#tpu.dimension_semantics<parallel>], iteration_bounds = array<i64: 1>, scalar_prefetch = 0 : i64, scratch_operands = 0 : i64, tpu.core_type = #tpu.core_type<tc>, window_params = [{transform_indices = @transform_0, window_bounds = array<i64: 16, 128>}, {pipeline_mode = #tpu.pipeline_mode<synchronous>, transform_indices = @transform_1, window_bounds = array<i64: 1, 128>}, {transform_indices = @transform_2, window_bounds = array<i64: 16, 128>}]} {
    %c0 = arith.constant 0 : index
    %c0_0 = arith.constant 0 : index
    %0 = vector.load %arg1[%c0, %c0_0] : memref<16x128xbf16, #tpu.memory_space<vmem>>, vector<16x128xbf16>
    %c0_1 = arith.constant 0 : index
    %c0_2 = arith.constant 0 : index
    %1 = vector.load %arg2[%c0_1, %c0_2] : memref<1x128xbf16, #tpu.memory_space<vmem>>, vector<1x128xbf16>
    %2 = vector.broadcast %1 : vector<1x128xbf16> to vector<16x128xbf16>
    %3 = arith.mulf %0, %2 : vector<16x128xbf16>
    %4 = arith.extf %3 : vector<16x128xbf16> to vector<16x128xf32>
    %cst = arith.constant dense<0.000000e+00> : vector<16xf32>
    %5 = vector.multi_reduction <add>, %4, %cst [1] : vector<16x128xf32> to vector<16xf32>
    %6 = vector.shape_cast %5 : vector<16xf32> to vector<16x1xf32>
    %7 = arith.truncf %6 : vector<16x1xf32> to vector<16x1xbf16>
    %8 = vector.broadcast %7 : vector<16x1xbf16> to vector<16x128xbf16>
    %9 = vector.broadcast %1 : vector<1x128xbf16> to vector<16x128xbf16>
    %10 = arith.mulf %8, %9 : vector<16x128xbf16>
    %11 = arith.subf %0, %10 : vector<16x128xbf16>
    %c0_3 = arith.constant 0 : index
    %c0_4 = arith.constant 0 : index
    %12 = vector.load %arg3[%c0_3, %c0_4] : memref<16x128xbf16, #tpu.memory_space<vmem>>, vector<16x128xbf16>
    tpu.vector_store %arg3[%c0_3, %c0_4], %11 {strides = array<i32>} : memref<16x128xbf16, #tpu.memory_space<vmem>>, vector<16x128xbf16>,
    return
  }
  func.func @transform_0(%arg0: i32) -> (i32, i32) {
    %c0_i32 = arith.constant 0 : i32
    %c0_i32_0 = arith.constant 0 : i32
    return %arg0, %c0_i32 : i32, i32
  }
  func.func @transform_1(%arg0: i32) -> (i32, i32) {
    %c0_i32 = arith.constant 0 : i32
    %c0_i32_0 = arith.constant 0 : i32
    %c0_i32_1 = arith.constant 0 : i32
    return %c0_i32, %c0_i32_0 : i32, i32
  }
  func.func @transform_2(%arg0: i32) -> (i32, i32) {
    %c0_i32 = arith.constant 0 : i32
    %c0_i32_0 = arith.constant 0 : i32
    return %arg0, %c0_i32 : i32, i32
  }
}

</mosaic_0001>

<llo_original>
// kernel: _lambda_.1
$region0: #{_lambda_.1}
  #allocation0 [shape = 'u32[]', space=smem, size = 0x4, offset = 0x4, fixed_abs, tag = 'smem constant byte address 0x4 - core index']
  #allocation1 [shape = 'u32[144,128]{1,0:T(1,128)}', space=vmem, size = 0x12000, scoped, tag = 'internal scratch']
  %s0 = inlined_call_operand.hbm [shape: bf16[16,128], index: 0, kind: input, shape index: {}]
  %s1 = inlined_call_operand.hbm [shape: bf16[1,128], index: 1, kind: input, shape index: {}]
  %s2 = inlined_call_operand.hbm [shape: bf16[16,128], index: 2, kind: output, shape index: {}]
  %s3 = sld [smem:[#allocation0]]
  $region26: #{_lambda_.1} parent=0
    _
  %s5 = ssub.s32 1, %s3
  %s6 = scalar_select 0, %s5, %s3
  $region1: #{_lambda_.1} parent=0
    #allocation2 [shape = 'u8[4096]{0}', space=vmem, size = 0x1000, scoped, tag = 'input window, operand 0, single buffered']
    #allocation3 [shape = 's32[1]{0}', space=sflag, size = 0x4, scoped, tag = 'scoped memory for _lambda_.1']
    #allocation4 [shape = 's32[1]{0}', space=sflag, size = 0x4, scoped, tag = 'scoped memory for _lambda_.1']
    #allocation5 [shape = 'u8[512]{0}', space=vmem, size = 0x400, scoped, tag = 'input window, operand 1, single buffered']
    #allocation6 [shape = 's32[1]{0}', space=sflag, size = 0x4, scoped, tag = 'scoped memory for _lambda_.1']
    #allocation7 [shape = 'u8[4096]{0}', space=vmem, size = 0x1000, scoped, tag = 'output window, operand 0, single buffered']
    %7 = vsyncpa [#allocation3], 0
    %8 = vsyncpa [#allocation6], 0
    %9 = vsyncpa [#allocation4], 0
    // Predicated region
    $region2: #{_lambda_.1} parent=1 // pred_check
      _
    $region3: #{_lambda_.1} parent=1 // pred_check_branch
      %11 = sbr.rel (0) target = $region5
    $region4: #{_lambda_.1} parent=1 // pred_region
      %s13 = ssub.s32 128, 128
      %14 = vsyncadd [#allocation3], %s13
      %s15 = sshll.u32 [#allocation2], 4
      %s16 = int_to_ptr.vmem [resolvable:$true] %s15
      %21 = dma.hbm_to_vmem [thread:$0]  %s0, 128, %s16, [#allocation3], 64, 64, 4
    $region5: #{_lambda_.1} parent=1 // pred_fallthru
      _
    // Predicated region
    $region6: #{_lambda_.1} parent=1 // pred_check
      _
    $region7: #{_lambda_.1} parent=1 // pred_check_branch
      %23 = sbr.rel (0) target = $region9
    $region8: #{_lambda_.1} parent=1 // pred_region
      %s25 = ssub.s32 16, 16
      %26 = vsyncadd [#allocation6], %s25
      %s28 = sshll.u32 [#allocation5], 4
      %s29 = int_to_ptr.vmem [resolvable:$true] %s28
      %31 = dma.hbm_to_vmem [thread:$0]  %s1, 16, %s29, [#allocation6]
    $region9: #{_lambda_.1} parent=1 // pred_fallthru
      _
    // Predicated region
    $region10: #{_lambda_.1} parent=1 // pred_check
      _
    $region11: #{_lambda_.1} parent=1 // pred_check_branch
      %33 = sbr.rel (0) target = $region13
    $region12: #{_lambda_.1} parent=1 // pred_region
      %34 = dma.done [#allocation3], 128
    $region13: #{_lambda_.1} parent=1 // pred_fallthru
      _
    // Predicated region
    $region14: #{_lambda_.1} parent=1 // pred_check
      _
    $region15: #{_lambda_.1} parent=1 // pred_check_branch
      %36 = sbr.rel (0) target = $region17
    $region16: #{_lambda_.1} parent=1 // pred_region
      %37 = dma.done [#allocation6], 16
    $region17: #{_lambda_.1} parent=1 // pred_fallthru
      _
    %v38 = vld [vmem:[#allocation2] sm:$0xf]
    %v39 = vld [vmem:[#allocation2 + $0x4] sm:$0xf]
    %v40 = vld [vmem:[#allocation5] sm:$0x1]
    %v42 = vpack.i.b16 %v40, %v40
    %v44 = vlaneseq
    %v45 = vshrl.u32 %v44, 7
    %v46 = vsub.s32 0, %v45
    %v47 = vrot.slane %v42, %v46
    %v49 = vunpack.c.l.b16 %v47
    %v50 = vpack.c.b16 %v49, %v49
    %v52 = vmul.bf16 %v38, %v50
    %v53 = vmul.bf16 %v39, %v50
    %v54 = vunpack.c.l.bf16 %v52
    %v55 = vunpack.c.l.bf16 %v53
    %56 = vadd.xlane.f32.xlu0 %v54
    %v57 = vpop.xlane.xlu0 %56
    %58 = vadd.xlane.f32.xlu0 %v55
    %v59 = vpop.xlane.xlu0 %58
    %v60 = vpack.c.bf16 %v59, %v57
    %v61 = vmul.bf16 %v60, %v47
    %v63 = vunpack.c.l.b16 %v61
    %v64 = vunpack.c.h.b16 %v61
    %v65 = vpack.c.b16 %v63, %v63
    %v66 = vpack.c.b16 %v64, %v64
    %v69 = vsub.bf16 %v38, %v65
    %v70 = vsub.bf16 %v39, %v66
    %71 = vst [vmem:[#allocation7] sm:$0xf] %v69
    %72 = vst [vmem:[#allocation7 + $0x4] sm:$0xf] %v70
    // Predicated region
    $region18: #{_lambda_.1} parent=1 // pred_check
      _
    $region19: #{_lambda_.1} parent=1 // pred_check_branch
      %74 = sbr.rel (0) target = $region21
    $region20: #{_lambda_.1} parent=1 // pred_region
      %s76 = ssub.s32 128, 128
      %77 = vsyncadd [#allocation4], %s76
      %s78 = sshll.u32 [#allocation7], 4
      %s79 = int_to_ptr.vmem [resolvable:$true] %s78
      %84 = dma.vmem_to_hbm [thread:$0]  %s79, 128, %s2, [#allocation4], 64, 64, 4
    $region21: #{_lambda_.1} parent=1 // pred_fallthru
      _
    // Predicated region
    $region22: #{_lambda_.1} parent=1 // pred_check
      _
    $region23: #{_lambda_.1} parent=1 // pred_check_branch
      %86 = sbr.rel (0) target = $region25
    $region24: #{_lambda_.1} parent=1 // pred_region
      %87 = dma.done [#allocation4], 128
    $region25: #{_lambda_.1} parent=1 // pred_fallthru
      _
    %88 = vsyncpa [#allocation3], 1
    %89 = vsyncpa [#allocation6], 1
    %90 = vsyncpa [#allocation4], 1

</llo_original>
